<compile_context>
chip_gen: v5e
topology: v5e:2x2
jax: 0.10.0
libtpu: 0.0.40
codegen_flags: <defaults>
</compile_context>

<pallas_src>
import functools

import jax
import jax.numpy as jnp
from jax.experimental import pallas as pl
from jax.experimental.pallas import tpu as pltpu


def _round_up(x, m):
    return ((x + m - 1) // m) * m


def _cdiv(a, b):
    return -(-a // b)


def _mlp_softmax_kernel(x_ref, w1_ref, b1_ref, w2_ref, b2_ref, o_ref, *,
                        n_classes):
    # fc1: (TB, F)bf16 @ (F, QP)bf16 -> f32 on the MXU, + f32 bias, EUP tanh.
    h = jnp.dot(x_ref[...], w1_ref[...], preferred_element_type=jnp.float32)
    h = jnp.tanh(h + b1_ref[...])
    # fc2: cast h to bf16 so the second matmul also runs at bf16 MXU rate.
    # Padded QP cols of h are tanh(0+0)=0 and the matching W2 rows are 0.
    logits = jnp.dot(h.astype(w2_ref.dtype), w2_ref[...],
                     preferred_element_type=jnp.float32)
    logits = logits + b2_ref[...]          # padded class cols -> -1e30 (f32)
    # Row-wise softmax (dim=1 of the (batch, classes) layout), f32 throughout.
    m = jnp.max(logits, axis=-1, keepdims=True)
    e = jnp.exp(logits - m)                # exp(-1e30 - m) == 0
    denom = jnp.sum(e, axis=-1, keepdims=True)
    # Store only the real class columns -> (TB, C) output block, 32x less
    # HBM writeback than the lane-padded (TB, 128) slab.
    o_ref[...] = (e[:, :n_classes] / denom).astype(o_ref.dtype)


@functools.partial(jax.jit, static_argnames=("block_b",))
def classical_transfer_learning_forward(x, w1, b1, w2, b2, *, block_b=1024):
    """x: (B, F); w1: (F, Q); b1: (1, Q); w2: (Q, C); b2: (1, C) -> (B, C).

    Weights are stored pre-transposed to (in, out) so the kernel runs plain
    `x @ W` MXU matmuls.
    """
    B, F = x.shape
    Q = w1.shape[1]
    C = w2.shape[1]
    out_dtype = x.dtype

    # Lane-pad hidden / class dims to multiples of 128 for dense compute.
    QP = _round_up(max(Q, 128), 128)
    CP = _round_up(max(C, 128), 128)

    # --- batch tiling ------------------------------------------------------
    # Minimize padding: split B into n_tiles ~ B/block_b tiles, rounded up to
    # an even count (when B is big enough) so v7x's two TensorCores both get
    # work under dimension_semantics=("parallel",).  TB is a multiple of 16
    # (bf16 sublane packing).
    n_tiles = max(1, _cdiv(B, block_b))
    if B >= 32 and n_tiles % 2:
        n_tiles += 1
    TB = _round_up(_cdiv(B, n_tiles), 16)
    # VMEM cap: double-buffered x tile (bf16, lane-padded to 128) + out tile
    # (f32) cost ~1.5 KiB/row; cap keeps us well under v7x's 64 MiB VMEM.
    MAX_TB = 8192
    if TB > MAX_TB:
        TB = MAX_TB
        n_tiles = _cdiv(B, TB)
        if B >= 32 and n_tiles % 2:
            n_tiles += 1
    Bp = n_tiles * TB

    # --- operand prep ------------------------------------------------------
    xp = x if Bp == B else jnp.pad(x, ((0, Bp - B), (0, 0)))
    xp = xp.astype(jnp.bfloat16)                                  # streamed
    w1p = jnp.pad(w1, ((0, 0), (0, QP - Q))).astype(jnp.bfloat16)  # resident
    b1p = jnp.pad(b1, ((0, 0), (0, QP - Q))).astype(jnp.float32)
    w2p = jnp.pad(w2, ((0, QP - Q), (0, CP - C))).astype(jnp.bfloat16)
    b2p = jnp.pad(b2.astype(jnp.float32), ((0, 0), (0, CP - C)))
    # Mask padded class columns out of the softmax via the f32 bias (-1e30).
    col = jax.lax.broadcasted_iota(jnp.int32, (1, CP), 1)
    b2p = jnp.where(col < C, b2p, jnp.float32(-1e30))

    cost = pl.CostEstimate(
        flops=2 * Bp * F * QP + 2 * Bp * QP * CP,
        transcendentals=Bp * (QP + CP),
        bytes_accessed=(2 * Bp * F + 2 * (F * QP + QP * CP)
                        + 4 * (QP + CP) + 4 * Bp * C),
    )

    kernel = functools.partial(_mlp_softmax_kernel, n_classes=C)
    out_p = pl.pallas_call(
        kernel,
        out_shape=jax.ShapeDtypeStruct((Bp, C), out_dtype),
        grid_spec=pltpu.PrefetchScalarGridSpec(
            num_scalar_prefetch=0,
            grid=(n_tiles,),
            in_specs=[
                pl.BlockSpec((TB, F), lambda i: (i, 0)),   # x tile, pipelined
                pl.BlockSpec((F, QP), lambda i: (0, 0)),   # W1, resident
                pl.BlockSpec((1, QP), lambda i: (0, 0)),   # b1, resident
                pl.BlockSpec((QP, CP), lambda i: (0, 0)),  # W2, resident
                pl.BlockSpec((1, CP), lambda i: (0, 0)),   # b2, resident
            ],
            out_specs=pl.BlockSpec((TB, C), lambda i: (i, 0)),
        ),
        compiler_params=pltpu.CompilerParams(
            dimension_semantics=("parallel",),
        ),
        cost_estimate=cost,
    )(xp, w1p, b1p, w2p, b2p)

    return out_p if Bp == B else out_p[:B]


def init_params(key, num_of_features, n_qubits, n_classes):
    """Deterministic init mimicking nn.Linear default U(-1/sqrt(fan_in), +)."""
    k1, k2, k3, k4 = jax.random.split(key, 4)
    bound1 = 1.0 / jnp.sqrt(num_of_features)
    bound2 = 1.0 / jnp.sqrt(n_qubits)
    # stored transposed: (in, out)
    w1 = jax.random.uniform(k1, (num_of_features, n_qubits), jnp.float32,
                            -bound1, bound1)
    b1 = jax.random.uniform(k2, (1, n_qubits), jnp.float32, -bound1, bound1)
    w2 = jax.random.uniform(k3, (n_qubits, n_classes), jnp.float32,
                            -bound2, bound2)
    b2 = jax.random.uniform(k4, (1, n_classes), jnp.float32, -bound2, bound2)
    return w1, b1, w2, b2


if __name__ == "__main__":
    num_of_features = 32
    n_qubits = 8
    n_classes = 4
    batch = 512          # -> 2 batch tiles of 256 rows (pipelined / 2-TC)

    key = jax.random.PRNGKey(0)
    kx, kp = jax.random.split(key)
    x = jax.random.normal(kx, (batch, num_of_features), jnp.float32)
    w1, b1, w2, b2 = init_params(kp, num_of_features, n_qubits, n_classes)

    out = classical_transfer_learning_forward(x, w1, b1, w2, b2)
    out = jax.block_until_ready(out)

    # reference check in plain JAX (f32 reference vs bf16-operand kernel)
    h_ref = jnp.tanh(x @ w1 + b1)
    logits_ref = h_ref @ w2 + b2
    ref = jax.nn.softmax(logits_ref, axis=1)
    assert out.shape == (batch, n_classes)
    max_err = float(jnp.max(jnp.abs(out - ref)))
    assert jnp.allclose(out, ref, atol=3e-3, rtol=3e-3), max_err
    # rows still sum to 1 despite lane-padded softmax compute
    assert jnp.allclose(jnp.sum(out, axis=1), 1.0, atol=2e-3)

    print("KERNEL_OK")
</pallas_src>

<mosaic_0001>
module attributes {stable_mosaic.version = 11 : i64} {
  func.func @_mlp_softmax_kernel(%arg0: i32, %arg1: memref<256x32xbf16, #tpu.memory_space<vmem>>, %arg2: memref<32x128xbf16, #tpu.memory_space<vmem>>, %arg3: memref<1x128xf32, #tpu.memory_space<vmem>>, %arg4: memref<128x128xbf16, #tpu.memory_space<vmem>>, %arg5: memref<1x128xf32, #tpu.memory_space<vmem>>, %arg6: memref<256x4xf32, #tpu.memory_space<vmem>>) attributes {dimension_semantics = [#tpu.dimension_semantics<parallel>], iteration_bounds = array<i64: 2>, scalar_prefetch = 0 : i64, scratch_operands = 0 : i64, tpu.core_type = #tpu.core_type<tc>, window_params = [{transform_indices = @transform_0, window_bounds = array<i64: 256, 32>}, {pipeline_mode = #tpu.pipeline_mode<synchronous>, transform_indices = @transform_1, window_bounds = array<i64: 32, 128>}, {pipeline_mode = #tpu.pipeline_mode<synchronous>, transform_indices = @transform_2, window_bounds = array<i64: 1, 128>}, {pipeline_mode = #tpu.pipeline_mode<synchronous>, transform_indices = @transform_3, window_bounds = array<i64: 128, 128>}, {pipeline_mode = #tpu.pipeline_mode<synchronous>, transform_indices = @transform_4, window_bounds = array<i64: 1, 128>}, {transform_indices = @transform_5, window_bounds = array<i64: 256, 4>}]} {
    %c0 = arith.constant 0 : index
    %c0_0 = arith.constant 0 : index
    %0 = vector.load %arg1[%c0, %c0_0] : memref<256x32xbf16, #tpu.memory_space<vmem>>, vector<256x32xbf16>
    %c0_1 = arith.constant 0 : index
    %c0_2 = arith.constant 0 : index
    %1 = vector.load %arg2[%c0_1, %c0_2] : memref<32x128xbf16, #tpu.memory_space<vmem>>, vector<32x128xbf16>
    %cst = arith.constant dense<0.000000e+00> : vector<256x128xf32>
    %2 = tpu.matmul %0, %1, %cst {dimension_numbers = #tpu.dot_dimension_numbers<[1], [0], [0], [1], [0, 0, 1, 1], [], []>} : vector<256x32xbf16>, vector<32x128xbf16>, vector<256x128xf32> -> vector<256x128xf32>
    %c0_3 = arith.constant 0 : index
    %c0_4 = arith.constant 0 : index
    %3 = vector.load %arg3[%c0_3, %c0_4] : memref<1x128xf32, #tpu.memory_space<vmem>>, vector<1x128xf32>
    %4 = vector.broadcast %3 : vector<1x128xf32> to vector<256x128xf32>
    %5 = arith.addf %2, %4 : vector<256x128xf32>
    %6 = math.tanh %5 : vector<256x128xf32>
    %7 = arith.truncf %6 : vector<256x128xf32> to vector<256x128xbf16>
    %c0_5 = arith.constant 0 : index
    %c0_6 = arith.constant 0 : index
    %8 = vector.load %arg4[%c0_5, %c0_6] : memref<128x128xbf16, #tpu.memory_space<vmem>>, vector<128x128xbf16>
    %cst_7 = arith.constant dense<0.000000e+00> : vector<256x128xf32>
    %9 = tpu.matmul %7, %8, %cst_7 {dimension_numbers = #tpu.dot_dimension_numbers<[1], [0], [0], [1], [0, 0, 1, 1], [], []>} : vector<256x128xbf16>, vector<128x128xbf16>, vector<256x128xf32> -> vector<256x128xf32>
    %c0_8 = arith.constant 0 : index
    %c0_9 = arith.constant 0 : index
    %10 = vector.load %arg5[%c0_8, %c0_9] : memref<1x128xf32, #tpu.memory_space<vmem>>, vector<1x128xf32>
    %11 = vector.broadcast %10 : vector<1x128xf32> to vector<256x128xf32>
    %12 = arith.addf %9, %11 : vector<256x128xf32>
    %cst_10 = arith.constant dense<0xFF800000> : vector<256xf32>
    %13 = vector.multi_reduction <maximumf>, %12, %cst_10 [1] : vector<256x128xf32> to vector<256xf32>
    %14 = vector.shape_cast %13 : vector<256xf32> to vector<256x1xf32>
    %15 = vector.broadcast %14 : vector<256x1xf32> to vector<256x128xf32>
    %16 = arith.subf %12, %15 : vector<256x128xf32>
    %17 = math.exp %16 : vector<256x128xf32>
    %cst_11 = arith.constant dense<0.000000e+00> : vector<256xf32>
    %18 = vector.multi_reduction <add>, %17, %cst_11 [1] : vector<256x128xf32> to vector<256xf32>
    %19 = vector.shape_cast %18 : vector<256xf32> to vector<256x1xf32>
    %20 = vector.extract_strided_slice %17 {offsets = [0, 0], sizes = [256, 4], strides = [1, 1]} : vector<256x128xf32> to vector<256x4xf32>
    %21 = vector.broadcast %19 : vector<256x1xf32> to vector<256x4xf32>
    %22 = arith.divf %20, %21 : vector<256x4xf32>
    %c0_12 = arith.constant 0 : index
    %c0_13 = arith.constant 0 : index
    %23 = vector.load %arg6[%c0_12, %c0_13] : memref<256x4xf32, #tpu.memory_space<vmem>>, vector<256x4xf32>
    tpu.vector_store %arg6[%c0_12, %c0_13], %22 {strides = array<i32>} : memref<256x4xf32, #tpu.memory_space<vmem>>, vector<256x4xf32>,
    return
  }
  func.func @transform_0(%arg0: i32) -> (i32, i32) {
    %c0_i32 = arith.constant 0 : i32
    %c0_i32_0 = arith.constant 0 : i32
    return %arg0, %c0_i32 : i32, i32
  }
  func.func @transform_1(%arg0: i32) -> (i32, i32) {
    %c0_i32 = arith.constant 0 : i32
    %c0_i32_0 = arith.constant 0 : i32
    %c0_i32_1 = arith.constant 0 : i32
    return %c0_i32, %c0_i32_0 : i32, i32
  }
  func.func @transform_2(%arg0: i32) -> (i32, i32) {
    %c0_i32 = arith.constant 0 : i32
    %c0_i32_0 = arith.constant 0 : i32
    %c0_i32_1 = arith.constant 0 : i32
    return %c0_i32, %c0_i32_0 : i32, i32
  }
  func.func @transform_3(%arg0: i32) -> (i32, i32) {
    %c0_i32 = arith.constant 0 : i32
    %c0_i32_0 = arith.constant 0 : i32
    %c0_i32_1 = arith.constant 0 : i32
    return %c0_i32, %c0_i32_0 : i32, i32
  }
  func.func @transform_4(%arg0: i32) -> (i32, i32) {
    %c0_i32 = arith.constant 0 : i32
    %c0_i32_0 = arith.constant 0 : i32
    %c0_i32_1 = arith.constant 0 : i32
    return %c0_i32, %c0_i32_0 : i32, i32
  }
  func.func @transform_5(%arg0: i32) -> (i32, i32) {
    %c0_i32 = arith.constant 0 : i32
    %c0_i32_0 = arith.constant 0 : i32
    return %arg0, %c0_i32 : i32, i32
  }
}

</mosaic_0001>

<llo_original>
// kernel: classical_transfer_learning_forward.1
$region0: #{classical_transfer_learning_forward.1}
  #allocation0 [shape = 'u32[]', space=smem, size = 0x4, offset = 0x4, fixed_abs, tag = 'smem constant byte address 0x4 - core index']
  #allocation1 [shape = 'u32[72,128]{1,0:T(1,128)}', space=vmem, size = 0x9000, scoped, tag = 'internal scratch']
  %s0 = inlined_call_operand.vmem [shape: bf16[512,32], index: 0, kind: input, shape index: {}]
  %s1 = inlined_call_operand.vmem [shape: bf16[32,128], index: 1, kind: input, shape index: {}]
  %s2 = inlined_call_operand.vmem [shape: f32[1,128], index: 2, kind: input, shape index: {}]
  %s3 = inlined_call_operand.vmem [shape: bf16[128,128], index: 3, kind: input, shape index: {}]
  %s4 = inlined_call_operand.vmem [shape: f32[1,128], index: 4, kind: input, shape index: {}]
  %s5 = inlined_call_operand.vmem [shape: f32[512,4], index: 5, kind: output, shape index: {}]
  %s6 = sld [smem:[#allocation0]]
  $region53: #{classical_transfer_learning_forward.1} parent=0
    _
  %s8 = ssub.s32 1, %s6
  %s9 = scalar_select 0, %s8, %s6
  loop: start=0, step=1, limit=4
  $region2: #{classical_transfer_learning_forward.1} parent=0 // loop_pre_header
    _
  $region3: #{classical_transfer_learning_forward.1} parent=0 // loop_header
    %s11 = sphi 0, %s15
    %p12 = scmp.ge.s32.totalorder %s11, 4
    %s21 = sphi 0, %s23
    %s24 = sphi 0, %s21
    %s25 = sphi 0, %s24
    %s41 = sphi 0, %s25
    %s45 = sphi 0, %s45
    %s47 = sphi 0, %s45
    %s48 = sphi 0, %s47
    %s62 = sphi 0, %s48
    %s66 = sphi 0, %s66
    %s68 = sphi 0, %s66
    %s69 = sphi 0, %s68
    %s83 = sphi 0, %s69
    %s87 = sphi 0, %s87
    %s89 = sphi 0, %s87
    %s90 = sphi 0, %s89
    %s104 = sphi 0, %s90
    %s108 = sphi 0, %s108
    %s110 = sphi 0, %s108
    %s111 = sphi 0, %s110
    %s125 = sphi 0, %s111
    %s131 = sphi 0, %s133
    %s134 = sphi 0, %s131
    %s135 = sphi 0, %s134
    %s151 = sphi 0, %s135
  $region4: #{classical_transfer_learning_forward.1} parent=0 // loop_header_branch
    %14 = sbr.rel (%p12) target = $region8
  $region5: #{classical_transfer_learning_forward.1} parent=0 // loop_body
    %s16 = ssub.s32 %s11, 1
    %s17 = ssub.s32 %s11, 2
    %s18 = sadd.s32 %s11, 1
    %s19 = ssub.s32 %s11, %s18
    %p20 = scmp.eq.s32.totalorder %s19, 0
    %s22 = sadd.s32 %s21, 1
    %s23 = scalar_select %p20, %s21, %s22
    %p26 = pneg %p20
    %p27 = scmp.eq.s32.totalorder %s11, 1
    %p28 = por %p26, %p27
    %p29 = scmp.ne.s32.totalorder %s21, %s24
    %p30 = scmp.eq.s32.totalorder %s11, 0
    %p31 = por %p29, %p30
    %p32 = scmp.ne.s32.totalorder %s21, %s24
    %p33 = scmp.eq.s32.totalorder %s16, 1
    %p34 = por %p32, %p33
    %p35 = scmp.ne.s32.totalorder %s24, %s25
    %p36 = scmp.eq.s32.totalorder %s16, 0
    %p37 = por %p35, %p36
    %p38 = scmp.ne.s32.totalorder %s24, %s25
    %p39 = scmp.eq.s32.totalorder %s17, 1
    %p40 = por %p38, %p39
    %p42 = scmp.ne.s32.totalorder %s25, %s41
    %p43 = scmp.eq.s32.totalorder %s17, 0
    %p44 = por %p42, %p43
    %s46 = sadd.s32 %s45, 1
    %p49 = scmp.eq.s32.totalorder %s11, 1
    %p50 = scmp.ne.s32.totalorder %s45, %s47
    %p51 = scmp.eq.s32.totalorder %s11, 0
    %p52 = por %p50, %p51
    %p53 = scmp.ne.s32.totalorder %s45, %s47
    %p54 = scmp.eq.s32.totalorder %s16, 1
    %p55 = por %p53, %p54
    %p56 = scmp.ne.s32.totalorder %s47, %s48
    %p57 = scmp.eq.s32.totalorder %s16, 0
    %p58 = por %p56, %p57
    %p59 = scmp.ne.s32.totalorder %s47, %s48
    %p60 = scmp.eq.s32.totalorder %s17, 1
    %p61 = por %p59, %p60
    %p63 = scmp.ne.s32.totalorder %s48, %s62
    %p64 = scmp.eq.s32.totalorder %s17, 0
    %p65 = por %p63, %p64
    %s67 = sadd.s32 %s66, 1
    %p70 = scmp.eq.s32.totalorder %s11, 1
    %p71 = scmp.ne.s32.totalorder %s66, %s68
    %p72 = scmp.eq.s32.totalorder %s11, 0
    %p73 = por %p71, %p72
    %p74 = scmp.ne.s32.totalorder %s66, %s68
    %p75 = scmp.eq.s32.totalorder %s16, 1
    %p76 = por %p74, %p75
    %p77 = scmp.ne.s32.totalorder %s68, %s69
    %p78 = scmp.eq.s32.totalorder %s16, 0
    %p79 = por %p77, %p78
    %p80 = scmp.ne.s32.totalorder %s68, %s69
    %p81 = scmp.eq.s32.totalorder %s17, 1
    %p82 = por %p80, %p81
    %p84 = scmp.ne.s32.totalorder %s69, %s83
    %p85 = scmp.eq.s32.totalorder %s17, 0
    %p86 = por %p84, %p85
    %s88 = sadd.s32 %s87, 1
    %p91 = scmp.eq.s32.totalorder %s11, 1
    %p92 = scmp.ne.s32.totalorder %s87, %s89
    %p93 = scmp.eq.s32.totalorder %s11, 0
    %p94 = por %p92, %p93
    %p95 = scmp.ne.s32.totalorder %s87, %s89
    %p96 = scmp.eq.s32.totalorder %s16, 1
    %p97 = por %p95, %p96
    %p98 = scmp.ne.s32.totalorder %s89, %s90
    %p99 = scmp.eq.s32.totalorder %s16, 0
    %p100 = por %p98, %p99
    %p101 = scmp.ne.s32.totalorder %s89, %s90
    %p102 = scmp.eq.s32.totalorder %s17, 1
    %p103 = por %p101, %p102
    %p105 = scmp.ne.s32.totalorder %s90, %s104
    %p106 = scmp.eq.s32.totalorder %s17, 0
    %p107 = por %p105, %p106
    %s109 = sadd.s32 %s108, 1
    %p112 = scmp.eq.s32.totalorder %s11, 1
    %p113 = scmp.ne.s32.totalorder %s108, %s110
    %p114 = scmp.eq.s32.totalorder %s11, 0
    %p115 = por %p113, %p114
    %p116 = scmp.ne.s32.totalorder %s108, %s110
    %p117 = scmp.eq.s32.totalorder %s16, 1
    %p118 = por %p116, %p117
    %p119 = scmp.ne.s32.totalorder %s110, %s111
    %p120 = scmp.eq.s32.totalorder %s16, 0
    %p121 = por %p119, %p120
    %p122 = scmp.ne.s32.totalorder %s110, %s111
    %p123 = scmp.eq.s32.totalorder %s17, 1
    %p124 = por %p122, %p123
    %p126 = scmp.ne.s32.totalorder %s111, %s125
    %p127 = scmp.eq.s32.totalorder %s17, 0
    %p128 = por %p126, %p127
    %s129 = ssub.s32 %s11, %s18
    %p130 = scmp.eq.s32.totalorder %s129, 0
    %s132 = sadd.s32 %s131, 1
    %s133 = scalar_select %p130, %s131, %s132
    %p136 = pneg %p130
    %p137 = scmp.eq.s32.totalorder %s11, 1
    %p138 = por %p136, %p137
    %p139 = scmp.ne.s32.totalorder %s131, %s134
    %p140 = scmp.eq.s32.totalorder %s11, 0
    %p141 = por %p139, %p140
    %p142 = scmp.ne.s32.totalorder %s131, %s134
    %p143 = scmp.eq.s32.totalorder %s16, 1
    %p144 = por %p142, %p143
    %p145 = scmp.ne.s32.totalorder %s134, %s135
    %p146 = scmp.eq.s32.totalorder %s16, 0
    %p147 = por %p145, %p146
    %p148 = scmp.ne.s32.totalorder %s134, %s135
    %p149 = scmp.eq.s32.totalorder %s17, 1
    %p150 = por %p148, %p149
    %p152 = scmp.ne.s32.totalorder %s135, %s151
    %p153 = scmp.eq.s32.totalorder %s17, 0
    %p154 = por %p152, %p153
    %p155 = scmp.le.s32.totalorder 1, %s11
    %p156 = scmp.lt.s32.totalorder %s11, 3
    %p157 = pnand %p155, %p156
    %p158 = pneg %p157
    // Predicated region
    $region9: #{classical_transfer_learning_forward.1} parent=5 // pred_check
      _
    $region10: #{classical_transfer_learning_forward.1} parent=5 // pred_check_branch
      %160 = sbr.rel (%p157) target = $region12
    $region11: #{classical_transfer_learning_forward.1} parent=5 // pred_region
      %s161 = ssub.s32 %s11, 1
      // Predicated region
      $region13: #{classical_transfer_learning_forward.1} parent=11 // pred_check
        %p162 = pneg %p58
      $region14: #{classical_transfer_learning_forward.1} parent=11 // pred_check_branch
        %164 = sbr.rel (%p162) target = $region16
      $region15: #{classical_transfer_learning_forward.1} parent=11 // pred_region
        _
      $region16: #{classical_transfer_learning_forward.1} parent=11 // pred_fallthru
        _
      // Predicated region
      $region17: #{classical_transfer_learning_forward.1} parent=11 // pred_check
        %p165 = pneg %p79
      $region18: #{classical_transfer_learning_forward.1} parent=11 // pred_check_branch
        %167 = sbr.rel (%p165) target = $region20
      $region19: #{classical_transfer_learning_forward.1} parent=11 // pred_region
        _
      $region20: #{classical_transfer_learning_forward.1} parent=11 // pred_fallthru
        _
      // Predicated region
      $region21: #{classical_transfer_learning_forward.1} parent=11 // pred_check
        %p168 = pneg %p100
      $region22: #{classical_transfer_learning_forward.1} parent=11 // pred_check_branch
        %170 = sbr.rel (%p168) target = $region24
      $region23: #{classical_transfer_learning_forward.1} parent=11 // pred_region
        _
      $region24: #{classical_transfer_learning_forward.1} parent=11 // pred_fallthru
        _
      // Predicated region
      $region25: #{classical_transfer_learning_forward.1} parent=11 // pred_check
        %p171 = pneg %p121
      $region26: #{classical_transfer_learning_forward.1} parent=11 // pred_check_branch
        %173 = sbr.rel (%p171) target = $region28
      $region27: #{classical_transfer_learning_forward.1} parent=11 // pred_region
        _
      $region28: #{classical_transfer_learning_forward.1} parent=11 // pred_fallthru
        _
    $region12: #{classical_transfer_learning_forward.1} parent=5 // pred_fallthru
      _
    %p174 = scmp.lt.s32.totalorder %s11, 2
    // Predicated region
    $region29: #{classical_transfer_learning_forward.1} parent=5 // pred_check
      %p175 = pneg %p174
    $region30: #{classical_transfer_learning_forward.1} parent=5 // pred_check_branch
      %177 = sbr.rel (%p175) target = $region32
    $region31: #{classical_transfer_learning_forward.1} parent=5 // pred_region
      // Predicated region
      $region33: #{classical_transfer_learning_forward.1} parent=31 // pred_check
        %p178 = pneg %p31
      $region34: #{classical_transfer_learning_forward.1} parent=31 // pred_check_branch
        %180 = sbr.rel (%p178) target = $region36
      $region35: #{classical_transfer_learning_forward.1} parent=31 // pred_region
        %s181 = smul.u32 32, %s11
        %p182 = scmp.lt.s32.totalorder %s181, 63
        %s183 = scalar_select %p182, %s181, 63
        %s184 = smul.addr %s183, 4
        %s185 = scalar_lea.vmem %s0, %s184
        %s186 = smul.u32 32, %s11
      $region36: #{classical_transfer_learning_forward.1} parent=31 // pred_fallthru
        _
    $region32: #{classical_transfer_learning_forward.1} parent=5 // pred_fallthru
      _
    %p187 = scmp.le.s32.totalorder 1, %s11
    %p188 = scmp.lt.s32.totalorder %s11, 3
    %p189 = pnand %p187, %p188
    %p190 = pneg %p189
    // Predicated region
    $region37: #{classical_transfer_learning_forward.1} parent=5 // pred_check
      _
    $region38: #{classical_transfer_learning_forward.1} parent=5 // pred_check_branch
      %192 = sbr.rel (%p189) target = $region40
    $region39: #{classical_transfer_learning_forward.1} parent=5 // pred_region
      %s193 = ssub.s32 %s11, 1
      %s194 = smul.u32 32, %s16
      %p195 = scmp.lt.s32.totalorder %s194, 63
      %s196 = scalar_select %p195, %s194, 63
      %s197 = smul.addr %s196, 4
      %s198 = scalar_lea.vmem %s0, %s197
      %p199 = pneg %p37
      %p200 = pneg %p34
      %p201 = pneg %p58
      %p202 = pneg %p55
      %p203 = pneg %p79
      %p204 = pneg %p76
      %p205 = pneg %p100
      %p206 = pneg %p97
      %p207 = pneg %p121
      %p208 = pneg %p118
      %p209 = pneg %p147
      %p210 = pneg %p144
      %s211 = smul.u32 32, %s16
      %p212 = scmp.lt.s32.totalorder %s211, 63
      %s213 = scalar_select %p212, %s211, 63
      %s214 = smul.addr %s213, 8
      %s215 = scalar_lea.vmem %s5, %s214
      %s216 = smul.u32 32, %s16
      %p217 = scmp.lt.s32.totalorder %s216, 63
      %s218 = scalar_select %p217, %s216, 63
      %s219 = smul.addr %s218, 4
      %s220 = scalar_lea.vmem %s0, %s219
      %s221 = smul.u32 32, %s16
      %s222 = smul.u32 32, %s16
      %p223 = scmp.lt.s32.totalorder %s222, 63
      %s224 = scalar_select %p223, %s222, 63
      %s225 = smul.addr %s224, 8
      %s226 = scalar_lea.vmem %s5, %s225
      %s227 = smul.u32 32, %s16
      %v229 = vld [vmem:[%s220] sm:$0xf]
      %v230 = vld [vmem:[%s220 + $0x4] sm:$0xf]
      %v231 = vld [vmem:[%s220 + $0x8] sm:$0xf]
      %v232 = vld [vmem:[%s220 + $0xc] sm:$0xf]
      %v233 = vld [vmem:[%s220 + $0x10] sm:$0xf]
      %v234 = vld [vmem:[%s220 + $0x14] sm:$0xf]
      %v235 = vld [vmem:[%s220 + $0x18] sm:$0xf]
      %v236 = vld [vmem:[%s220 + $0x1c] sm:$0xf]
      %v237 = vld [vmem:[%s220 + $0x20] sm:$0xf]
      %v238 = vld [vmem:[%s220 + $0x24] sm:$0xf]
      %v239 = vld [vmem:[%s220 + $0x28] sm:$0xf]
      %v240 = vld [vmem:[%s220 + $0x2c] sm:$0xf]
      %v241 = vld [vmem:[%s220 + $0x30] sm:$0xf]
      %v242 = vld [vmem:[%s220 + $0x34] sm:$0xf]
      %v243 = vld [vmem:[%s220 + $0x38] sm:$0xf]
      %v244 = vld [vmem:[%s220 + $0x3c] sm:$0xf]
      %v245 = vld [vmem:[%s220 + $0x40] sm:$0xf]
      %v246 = vld [vmem:[%s220 + $0x44] sm:$0xf]
      %v247 = vld [vmem:[%s220 + $0x48] sm:$0xf]
      %v248 = vld [vmem:[%s220 + $0x4c] sm:$0xf]
      %v249 = vld [vmem:[%s220 + $0x50] sm:$0xf]
      %v250 = vld [vmem:[%s220 + $0x54] sm:$0xf]
      %v251 = vld [vmem:[%s220 + $0x58] sm:$0xf]
      %v252 = vld [vmem:[%s220 + $0x5c] sm:$0xf]
      %v253 = vld [vmem:[%s220 + $0x60] sm:$0xf]
      %v254 = vld [vmem:[%s220 + $0x64] sm:$0xf]
      %v255 = vld [vmem:[%s220 + $0x68] sm:$0xf]
      %v256 = vld [vmem:[%s220 + $0x6c] sm:$0xf]
      %v257 = vld [vmem:[%s220 + $0x70] sm:$0xf]
      %v258 = vld [vmem:[%s220 + $0x74] sm:$0xf]
      %v259 = vld [vmem:[%s220 + $0x78] sm:$0xf]
      %v260 = vld [vmem:[%s220 + $0x7c] sm:$0xf]
      %v261 = vld [vmem:[%s1] sm:$0xf]
      %v262 = vld [vmem:[%s1 + $0x4] sm:$0xf]
      %v263 = vld [vmem:[%s1 + $0x8] sm:$0xf]
      %v264 = vld [vmem:[%s1 + $0xc] sm:$0xf]
      %v265 = vld [vmem:[%s2] sm:$0x1]
      %v267 = vperm.slane %v265, 0
      %v301 = vunpack.c.l.b16 %v229
      %v302 = vunpack.c.l.b16 %v230
      %v303 = vunpack.c.l.b16 %v231
      %v304 = vunpack.c.l.b16 %v232
      %v305 = vunpack.c.l.b16 %v233
      %v306 = vunpack.c.l.b16 %v234
      %v307 = vunpack.c.l.b16 %v235
      %v308 = vunpack.c.l.b16 %v236
      %v309 = vunpack.c.l.b16 %v237
      %v310 = vunpack.c.l.b16 %v238
      %v311 = vunpack.c.l.b16 %v239
      %v312 = vunpack.c.l.b16 %v240
      %v313 = vunpack.c.l.b16 %v241
      %v314 = vunpack.c.l.b16 %v242
      %v315 = vunpack.c.l.b16 %v243
      %v316 = vunpack.c.l.b16 %v244
      %v317 = vunpack.c.l.b16 %v245
      %v318 = vunpack.c.l.b16 %v246
      %v319 = vunpack.c.l.b16 %v247
      %v320 = vunpack.c.l.b16 %v248
      %v321 = vunpack.c.l.b16 %v249
      %v322 = vunpack.c.l.b16 %v250
      %v323 = vunpack.c.l.b16 %v251
      %v324 = vunpack.c.l.b16 %v252
      %v325 = vunpack.c.l.b16 %v253
      %v326 = vunpack.c.l.b16 %v254
      %v327 = vunpack.c.l.b16 %v255
      %v328 = vunpack.c.l.b16 %v256
      %v329 = vunpack.c.l.b16 %v257
      %v330 = vunpack.c.l.b16 %v258
      %v331 = vunpack.c.l.b16 %v259
      %v332 = vunpack.c.l.b16 %v260
      %v333 = vpack.c.b16 %v302, %v301
      %v334 = vpack.c.b16 %v304, %v303
      %v335 = vpack.c.b16 %v306, %v305
      %v336 = vpack.c.b16 %v308, %v307
      %v337 = vpack.c.b16 %v310, %v309
      %v338 = vpack.c.b16 %v312, %v311
      %v339 = vpack.c.b16 %v314, %v313
      %v340 = vpack.c.b16 %v316, %v315
      %v341 = vpack.c.b16 %v318, %v317
      %v342 = vpack.c.b16 %v320, %v319
      %v343 = vpack.c.b16 %v322, %v321
      %v344 = vpack.c.b16 %v324, %v323
      %v345 = vpack.c.b16 %v326, %v325
      %v346 = vpack.c.b16 %v328, %v327
      %v347 = vpack.c.b16 %v330, %v329
      %v348 = vpack.c.b16 %v332, %v331
      %v353 = vunpack.c.l.b16 %v261
      %v354 = vunpack.c.l.b16 %v262
      %v355 = vunpack.c.l.b16 %v263
      %v356 = vunpack.c.l.b16 %v264
      %v357 = vpack.c.b16 %v354, %v353
      %v358 = vpack.c.b16 %v356, %v355
      %vm361 = vcmask 261120
      %v363 = vsel %vm361, %v333, 0
      %v366 = vsel %vm361, %v334, 0
      %v369 = vsel %vm361, %v335, 0
      %v372 = vsel %vm361, %v336, 0
      %v375 = vsel %vm361, %v337, 0
      %v378 = vsel %vm361, %v338, 0
      %v381 = vsel %vm361, %v339, 0
      %v384 = vsel %vm361, %v340, 0
      %v387 = vsel %vm361, %v341, 0
      %v390 = vsel %vm361, %v342, 0
      %v393 = vsel %vm361, %v343, 0
      %v396 = vsel %vm361, %v344, 0
      %v399 = vsel %vm361, %v345, 0
      %v402 = vsel %vm361, %v346, 0
      %v405 = vsel %vm361, %v347, 0
      %v408 = vsel %vm361, %v348, 0
      %410 = vmatpush.bf16.msra.mxu0 0
      %411 = vmatpush.bf16.msra.mxu0 0
      %412 = vmatpush.bf16.msra.mxu0 0
      %413 = vmatpush.bf16.msra.mxu0 0
      %414 = vmatpush.bf16.msra.mxu0 0
      %415 = vmatpush.bf16.msra.mxu0 0
      %416 = vmatpush.bf16.msra.mxu0 %v358
      %417 = vmatpush.bf16.msra.mxu0 %v357
      %418 = vmatmul.bf16.gmra.mxu0 %v363
      %v419 = vpop.f32.mrf.mxu0
      %v420 = vadd.f32 %v267, %v419
      %v421 = vpop.f32.mrf.mxu0
      %v422 = vadd.f32 %v267, %v421
      %423 = vmatmul.bf16.gmra.mxu0 %v366
      %v424 = vpop.f32.mrf.mxu0
      %v425 = vadd.f32 %v267, %v424
      %v426 = vpop.f32.mrf.mxu0
      %v427 = vadd.f32 %v267, %v426
      %428 = vmatmul.bf16.gmra.mxu0 %v369
      %v429 = vpop.f32.mrf.mxu0
      %v430 = vadd.f32 %v267, %v429
      %v431 = vpop.f32.mrf.mxu0
      %v432 = vadd.f32 %v267, %v431
      %433 = vmatmul.bf16.gmra.mxu0 %v372
      %v434 = vpop.f32.mrf.mxu0
      %v435 = vadd.f32 %v267, %v434
      %v436 = vpop.f32.mrf.mxu0
      %v437 = vadd.f32 %v267, %v436
      %438 = vmatmul.bf16.gmra.mxu0 %v375
      %v439 = vpop.f32.mrf.mxu0
      %v440 = vadd.f32 %v267, %v439
      %v441 = vpop.f32.mrf.mxu0
      %v442 = vadd.f32 %v267, %v441
      %443 = vmatmul.bf16.gmra.mxu0 %v378
      %v444 = vpop.f32.mrf.mxu0
      %v445 = vadd.f32 %v267, %v444
      %v446 = vpop.f32.mrf.mxu0
      %v447 = vadd.f32 %v267, %v446
      %448 = vmatmul.bf16.gmra.mxu0 %v381
      %v449 = vpop.f32.mrf.mxu0
      %v450 = vadd.f32 %v267, %v449
      %v451 = vpop.f32.mrf.mxu0
      %v452 = vadd.f32 %v267, %v451
      %453 = vmatmul.bf16.gmra.mxu0 %v384
      %v454 = vpop.f32.mrf.mxu0
      %v455 = vadd.f32 %v267, %v454
      %v456 = vpop.f32.mrf.mxu0
      %v457 = vadd.f32 %v267, %v456
      %458 = vmatmul.bf16.gmra.mxu0 %v387
      %v459 = vpop.f32.mrf.mxu0
      %v460 = vadd.f32 %v267, %v459
      %v461 = vpop.f32.mrf.mxu0
      %v462 = vadd.f32 %v267, %v461
      %463 = vmatmul.bf16.gmra.mxu0 %v390
      %v464 = vpop.f32.mrf.mxu0
      %v465 = vadd.f32 %v267, %v464
      %v466 = vpop.f32.mrf.mxu0
      %v467 = vadd.f32 %v267, %v466
      %468 = vmatmul.bf16.gmra.mxu0 %v393
      %v469 = vpop.f32.mrf.mxu0
      %v470 = vadd.f32 %v267, %v469
      %v471 = vpop.f32.mrf.mxu0
      %v472 = vadd.f32 %v267, %v471
      %473 = vmatmul.bf16.gmra.mxu0 %v396
      %v474 = vpop.f32.mrf.mxu0
      %v475 = vadd.f32 %v267, %v474
      %v476 = vpop.f32.mrf.mxu0
      %v477 = vadd.f32 %v267, %v476
      %478 = vmatmul.bf16.gmra.mxu0 %v399
      %v479 = vpop.f32.mrf.mxu0
      %v480 = vadd.f32 %v267, %v479
      %v481 = vpop.f32.mrf.mxu0
      %v482 = vadd.f32 %v267, %v481
      %483 = vmatmul.bf16.gmra.mxu0 %v402
      %v484 = vpop.f32.mrf.mxu0
      %v485 = vadd.f32 %v267, %v484
      %v486 = vpop.f32.mrf.mxu0
      %v487 = vadd.f32 %v267, %v486
      %488 = vmatmul.bf16.gmra.mxu0 %v405
      %v489 = vpop.f32.mrf.mxu0
      %v490 = vadd.f32 %v267, %v489
      %v491 = vpop.f32.mrf.mxu0
      %v492 = vadd.f32 %v267, %v491
      %493 = vmatmul.bf16.gmra.mxu0 %v408
      %v494 = vpop.f32.mrf.mxu0
      %v495 = vadd.f32 %v267, %v494
      %v496 = vpop.f32.mrf.mxu0
      %v497 = vadd.f32 %v267, %v496
      %498 = vdwg.mxu0
      %v499 = vtanh.pop %v420
      %v500 = vtanh.pop %v422
      %v501 = vtanh.pop %v425
      %v502 = vtanh.pop %v427
      %v503 = vtanh.pop %v430
      %v504 = vtanh.pop %v432
      %v505 = vtanh.pop %v435
      %v506 = vtanh.pop %v437
      %v507 = vtanh.pop %v440
      %v508 = vtanh.pop %v442
      %v509 = vtanh.pop %v445
      %v510 = vtanh.pop %v447
      %v511 = vtanh.pop %v450
      %v512 = vtanh.pop %v452
      %v513 = vtanh.pop %v455
      %v514 = vtanh.pop %v457
      %v515 = vtanh.pop %v460
      %v516 = vtanh.pop %v462
      %v517 = vtanh.pop %v465
      %v518 = vtanh.pop %v467
      %v519 = vtanh.pop %v470
      %v520 = vtanh.pop %v472
      %v521 = vtanh.pop %v475
      %v522 = vtanh.pop %v477
      %v523 = vtanh.pop %v480
      %v524 = vtanh.pop %v482
      %v525 = vtanh.pop %v485
      %v526 = vtanh.pop %v487
      %v527 = vtanh.pop %v490
      %v528 = vtanh.pop %v492
      %v529 = vtanh.pop %v495
      %v530 = vtanh.pop %v497
      %v531 = vpack.c.bf16 %v500, %v499
      %v532 = vpack.c.bf16 %v502, %v501
      %v533 = vpack.c.bf16 %v504, %v503
      %v534 = vpack.c.bf16 %v506, %v505
      %v535 = vpack.c.bf16 %v508, %v507
      %v536 = vpack.c.bf16 %v510, %v509
      %v537 = vpack.c.bf16 %v512, %v511
      %v538 = vpack.c.bf16 %v514, %v513
      %v539 = vpack.c.bf16 %v516, %v515
      %v540 = vpack.c.bf16 %v518, %v517
      %v541 = vpack.c.bf16 %v520, %v519
      %v542 = vpack.c.bf16 %v522, %v521
      %v543 = vpack.c.bf16 %v524, %v523
      %v544 = vpack.c.bf16 %v526, %v525
      %v545 = vpack.c.bf16 %v528, %v527
      %v546 = vpack.c.bf16 %v530, %v529
      %v547 = vld [vmem:[%s3] sm:$0xf]
      %v548 = vld [vmem:[%s3 + $0x4] sm:$0xf]
      %v549 = vld [vmem:[%s3 + $0x8] sm:$0xf]
      %v550 = vld [vmem:[%s3 + $0xc] sm:$0xf]
      %v551 = vld [vmem:[%s3 + $0x10] sm:$0xf]
      %v552 = vld [vmem:[%s3 + $0x14] sm:$0xf]
      %v553 = vld [vmem:[%s3 + $0x18] sm:$0xf]
      %v554 = vld [vmem:[%s3 + $0x1c] sm:$0xf]
      %v555 = vld [vmem:[%s3 + $0x20] sm:$0xf]
      %v556 = vld [vmem:[%s3 + $0x24] sm:$0xf]
      %v557 = vld [vmem:[%s3 + $0x28] sm:$0xf]
      %v558 = vld [vmem:[%s3 + $0x2c] sm:$0xf]
      %v559 = vld [vmem:[%s3 + $0x30] sm:$0xf]
      %v560 = vld [vmem:[%s3 + $0x34] sm:$0xf]
      %v561 = vld [vmem:[%s3 + $0x38] sm:$0xf]
      %v562 = vld [vmem:[%s3 + $0x3c] sm:$0xf]
      %v563 = vld [vmem:[%s4] sm:$0x1]
      %v565 = vperm.slane %v563, 0
      %v583 = vunpack.c.l.b16 %v547
      %v584 = vunpack.c.l.b16 %v548
      %v585 = vunpack.c.l.b16 %v549
      %v586 = vunpack.c.l.b16 %v550
      %v587 = vunpack.c.l.b16 %v551
      %v588 = vunpack.c.l.b16 %v552
      %v589 = vunpack.c.l.b16 %v553
      %v590 = vunpack.c.l.b16 %v554
      %v591 = vunpack.c.l.b16 %v555
      %v592 = vunpack.c.l.b16 %v556
      %v593 = vunpack.c.l.b16 %v557
      %v594 = vunpack.c.l.b16 %v558
      %v595 = vunpack.c.l.b16 %v559
      %v596 = vunpack.c.l.b16 %v560
      %v597 = vunpack.c.l.b16 %v561
      %v598 = vunpack.c.l.b16 %v562
      %v599 = vpack.c.b16 %v584, %v583
      %v600 = vpack.c.b16 %v586, %v585
      %v601 = vpack.c.b16 %v588, %v587
      %v602 = vpack.c.b16 %v590, %v589
      %v603 = vpack.c.b16 %v592, %v591
      %v604 = vpack.c.b16 %v594, %v593
      %v605 = vpack.c.b16 %v596, %v595
      %v606 = vpack.c.b16 %v598, %v597
      %615 = vmatpush.bf16.msra.mxu0 %v606
      %616 = vmatpush.bf16.msra.mxu0 %v605
      %617 = vmatpush.bf16.msra.mxu0 %v604
      %618 = vmatpush.bf16.msra.mxu0 %v603
      %619 = vmatpush.bf16.msra.mxu0 %v602
      %620 = vmatpush.bf16.msra.mxu0 %v601
      %621 = vmatpush.bf16.msra.mxu0 %v600
      %622 = vmatpush.bf16.msra.mxu0 %v599
      %623 = vmatmul.bf16.gmra.mxu0 %v531
      %v624 = vpop.f32.mrf.mxu0
      %v625 = vadd.f32 %v565, %v624
      %v626 = vpop.f32.mrf.mxu0
      %v627 = vadd.f32 %v565, %v626
      %628 = vmatmul.bf16.gmra.mxu0 %v532
      %v629 = vpop.f32.mrf.mxu0
      %v630 = vadd.f32 %v565, %v629
      %v631 = vpop.f32.mrf.mxu0
      %v632 = vadd.f32 %v565, %v631
      %633 = vmatmul.bf16.gmra.mxu0 %v533
      %v634 = vpop.f32.mrf.mxu0
      %v635 = vadd.f32 %v565, %v634
      %v636 = vpop.f32.mrf.mxu0
      %v637 = vadd.f32 %v565, %v636
      %638 = vmatmul.bf16.gmra.mxu0 %v534
      %v639 = vpop.f32.mrf.mxu0
      %v640 = vadd.f32 %v565, %v639
      %v641 = vpop.f32.mrf.mxu0
      %v642 = vadd.f32 %v565, %v641
      %643 = vmatmul.bf16.gmra.mxu0 %v535
      %v644 = vpop.f32.mrf.mxu0
      %v645 = vadd.f32 %v565, %v644
      %v646 = vpop.f32.mrf.mxu0
      %v647 = vadd.f32 %v565, %v646
      %648 = vmatmul.bf16.gmra.mxu0 %v536
      %v649 = vpop.f32.mrf.mxu0
      %v650 = vadd.f32 %v565, %v649
      %v651 = vpop.f32.mrf.mxu0
      %v652 = vadd.f32 %v565, %v651
      %653 = vmatmul.bf16.gmra.mxu0 %v537
      %v654 = vpop.f32.mrf.mxu0
      %v655 = vadd.f32 %v565, %v654
      %v656 = vpop.f32.mrf.mxu0
      %v657 = vadd.f32 %v565, %v656
      %658 = vmatmul.bf16.gmra.mxu0 %v538
      %v659 = vpop.f32.mrf.mxu0
      %v660 = vadd.f32 %v565, %v659
      %v661 = vpop.f32.mrf.mxu0
      %v662 = vadd.f32 %v565, %v661
      %663 = vmatmul.bf16.gmra.mxu0 %v539
      %v664 = vpop.f32.mrf.mxu0
      %v665 = vadd.f32 %v565, %v664
      %v666 = vpop.f32.mrf.mxu0
      %v667 = vadd.f32 %v565, %v666
      %668 = vmatmul.bf16.gmra.mxu0 %v540
      %v669 = vpop.f32.mrf.mxu0
      %v670 = vadd.f32 %v565, %v669
      %v671 = vpop.f32.mrf.mxu0
      %v672 = vadd.f32 %v565, %v671
      %673 = vmatmul.bf16.gmra.mxu0 %v541
      %v674 = vpop.f32.mrf.mxu0
      %v675 = vadd.f32 %v565, %v674
      %v676 = vpop.f32.mrf.mxu0
      %v677 = vadd.f32 %v565, %v676
      %678 = vmatmul.bf16.gmra.mxu0 %v542
      %v679 = vpop.f32.mrf.mxu0
      %v680 = vadd.f32 %v565, %v679
      %v681 = vpop.f32.mrf.mxu0
      %v682 = vadd.f32 %v565, %v681
      %683 = vmatmul.bf16.gmra.mxu0 %v543
      %v684 = vpop.f32.mrf.mxu0
      %v685 = vadd.f32 %v565, %v684
      %v686 = vpop.f32.mrf.mxu0
      %v687 = vadd.f32 %v565, %v686
      %688 = vmatmul.bf16.gmra.mxu0 %v544
      %v689 = vpop.f32.mrf.mxu0
      %v690 = vadd.f32 %v565, %v689
      %v691 = vpop.f32.mrf.mxu0
      %v692 = vadd.f32 %v565, %v691
      %693 = vmatmul.bf16.gmra.mxu0 %v545
      %v694 = vpop.f32.mrf.mxu0
      %v695 = vadd.f32 %v565, %v694
      %v696 = vpop.f32.mrf.mxu0
      %v697 = vadd.f32 %v565, %v696
      %698 = vmatmul.bf16.gmra.mxu0 %v546
      %v699 = vpop.f32.mrf.mxu0
      %v700 = vadd.f32 %v565, %v699
      %v701 = vpop.f32.mrf.mxu0
      %v702 = vadd.f32 %v565, %v701
      %703 = vdwg.mxu0
      %704 = vmax.xlane.f32.xlu0 %v625
      %v705 = vpop.xlane.xlu0 %704
      %706 = vmax.xlane.f32.xlu0 %v627
      %v707 = vpop.xlane.xlu0 %706
      %708 = vmax.xlane.f32.xlu0 %v630
      %v709 = vpop.xlane.xlu0 %708
      %710 = vmax.xlane.f32.xlu0 %v632
      %v711 = vpop.xlane.xlu0 %710
      %712 = vmax.xlane.f32.xlu0 %v635
      %v713 = vpop.xlane.xlu0 %712
      %714 = vmax.xlane.f32.xlu0 %v637
      %v715 = vpop.xlane.xlu0 %714
      %716 = vmax.xlane.f32.xlu0 %v640
      %v717 = vpop.xlane.xlu0 %716
      %718 = vmax.xlane.f32.xlu0 %v642
      %v719 = vpop.xlane.xlu0 %718
      %720 = vmax.xlane.f32.xlu0 %v645
      %v721 = vpop.xlane.xlu0 %720
      %722 = vmax.xlane.f32.xlu0 %v647
      %v723 = vpop.xlane.xlu0 %722
      %724 = vmax.xlane.f32.xlu0 %v650
      %v725 = vpop.xlane.xlu0 %724
      %726 = vmax.xlane.f32.xlu0 %v652
      %v727 = vpop.xlane.xlu0 %726
      %728 = vmax.xlane.f32.xlu0 %v655
      %v729 = vpop.xlane.xlu0 %728
      %730 = vmax.xlane.f32.xlu0 %v657
      %v731 = vpop.xlane.xlu0 %730
      %732 = vmax.xlane.f32.xlu0 %v660
      %v733 = vpop.xlane.xlu0 %732
      %734 = vmax.xlane.f32.xlu0 %v662
      %v735 = vpop.xlane.xlu0 %734
      %736 = vmax.xlane.f32.xlu0 %v665
      %v737 = vpop.xlane.xlu0 %736
      %738 = vmax.xlane.f32.xlu0 %v667
      %v739 = vpop.xlane.xlu0 %738
      %740 = vmax.xlane.f32.xlu0 %v670
      %v741 = vpop.xlane.xlu0 %740
      %742 = vmax.xlane.f32.xlu0 %v672
      %v743 = vpop.xlane.xlu0 %742
      %744 = vmax.xlane.f32.xlu0 %v675
      %v745 = vpop.xlane.xlu0 %744
      %746 = vmax.xlane.f32.xlu0 %v677
      %v747 = vpop.xlane.xlu0 %746
      %748 = vmax.xlane.f32.xlu0 %v680
      %v749 = vpop.xlane.xlu0 %748
      %750 = vmax.xlane.f32.xlu0 %v682
      %v751 = vpop.xlane.xlu0 %750
      %752 = vmax.xlane.f32.xlu0 %v685
      %v753 = vpop.xlane.xlu0 %752
      %754 = vmax.xlane.f32.xlu0 %v687
      %v755 = vpop.xlane.xlu0 %754
      %756 = vmax.xlane.f32.xlu0 %v690
      %v757 = vpop.xlane.xlu0 %756
      %758 = vmax.xlane.f32.xlu0 %v692
      %v759 = vpop.xlane.xlu0 %758
      %760 = vmax.xlane.f32.xlu0 %v695
      %v761 = vpop.xlane.xlu0 %760
      %762 = vmax.xlane.f32.xlu0 %v697
      %v763 = vpop.xlane.xlu0 %762
      %764 = vmax.xlane.f32.xlu0 %v700
      %v765 = vpop.xlane.xlu0 %764
      %766 = vmax.xlane.f32.xlu0 %v702
      %v767 = vpop.xlane.xlu0 %766
      %v768 = vsub.f32 %v625, %v705
      %v769 = vsub.f32 %v627, %v707
      %v770 = vsub.f32 %v630, %v709
      %v771 = vsub.f32 %v632, %v711
      %v772 = vsub.f32 %v635, %v713
      %v773 = vsub.f32 %v637, %v715
      %v774 = vsub.f32 %v640, %v717
      %v775 = vsub.f32 %v642, %v719
      %v776 = vsub.f32 %v645, %v721
      %v777 = vsub.f32 %v647, %v723
      %v778 = vsub.f32 %v650, %v725
      %v779 = vsub.f32 %v652, %v727
      %v780 = vsub.f32 %v655, %v729
      %v781 = vsub.f32 %v657, %v731
      %v782 = vsub.f32 %v660, %v733
      %v783 = vsub.f32 %v662, %v735
      %v784 = vsub.f32 %v665, %v737
      %v785 = vsub.f32 %v667, %v739
      %v786 = vsub.f32 %v670, %v741
      %v787 = vsub.f32 %v672, %v743
      %v788 = vsub.f32 %v675, %v745
      %v789 = vsub.f32 %v677, %v747
      %v790 = vsub.f32 %v680, %v749
      %v791 = vsub.f32 %v682, %v751
      %v792 = vsub.f32 %v685, %v753
      %v793 = vsub.f32 %v687, %v755
      %v794 = vsub.f32 %v690, %v757
      %v795 = vsub.f32 %v692, %v759
      %v796 = vsub.f32 %v695, %v761
      %v797 = vsub.f32 %v697, %v763
      %v798 = vsub.f32 %v700, %v765
      %v799 = vsub.f32 %v702, %v767
      %v800 = vmul.f32 %v768, 1.442695
      %v801 = vpow.pop %v800
      %v802 = vmul.f32 %v769, 1.442695
      %v803 = vpow.pop %v802
      %v804 = vmul.f32 %v770, 1.442695
      %v805 = vpow.pop %v804
      %v806 = vmul.f32 %v771, 1.442695
      %v807 = vpow.pop %v806
      %v808 = vmul.f32 %v772, 1.442695
      %v809 = vpow.pop %v808
      %v810 = vmul.f32 %v773, 1.442695
      %v811 = vpow.pop %v810
      %v812 = vmul.f32 %v774, 1.442695
      %v813 = vpow.pop %v812
      %v814 = vmul.f32 %v775, 1.442695
      %v815 = vpow.pop %v814
      %v816 = vmul.f32 %v776, 1.442695
      %v817 = vpow.pop %v816
      %v818 = vmul.f32 %v777, 1.442695
      %v819 = vpow.pop %v818
      %v820 = vmul.f32 %v778, 1.442695
      %v821 = vpow.pop %v820
      %v822 = vmul.f32 %v779, 1.442695
      %v823 = vpow.pop %v822
      %v824 = vmul.f32 %v780, 1.442695
      %v825 = vpow.pop %v824
      %v826 = vmul.f32 %v781, 1.442695
      %v827 = vpow.pop %v826
      %v828 = vmul.f32 %v782, 1.442695
      %v829 = vpow.pop %v828
      %v830 = vmul.f32 %v783, 1.442695
      %v831 = vpow.pop %v830
      %v832 = vmul.f32 %v784, 1.442695
      %v833 = vpow.pop %v832
      %v834 = vmul.f32 %v785, 1.442695
      %v835 = vpow.pop %v834
      %v836 = vmul.f32 %v786, 1.442695
      %v837 = vpow.pop %v836
      %v838 = vmul.f32 %v787, 1.442695
      %v839 = vpow.pop %v838
      %v840 = vmul.f32 %v788, 1.442695
      %v841 = vpow.pop %v840
      %v842 = vmul.f32 %v789, 1.442695
      %v843 = vpow.pop %v842
      %v844 = vmul.f32 %v790, 1.442695
      %v845 = vpow.pop %v844
      %v846 = vmul.f32 %v791, 1.442695
      %v847 = vpow.pop %v846
      %v848 = vmul.f32 %v792, 1.442695
      %v849 = vpow.pop %v848
      %v850 = vmul.f32 %v793, 1.442695
      %v851 = vpow.pop %v850
      %v852 = vmul.f32 %v794, 1.442695
      %v853 = vpow.pop %v852
      %v854 = vmul.f32 %v795, 1.442695
      %v855 = vpow.pop %v854
      %v856 = vmul.f32 %v796, 1.442695
      %v857 = vpow.pop %v856
      %v858 = vmul.f32 %v797, 1.442695
      %v859 = vpow.pop %v858
      %v860 = vmul.f32 %v798, 1.442695
      %v861 = vpow.pop %v860
      %v862 = vmul.f32 %v799, 1.442695
      %v863 = vpow.pop %v862
      %864 = vadd.xlane.f32.xlu0 %v801
      %v865 = vpop.xlane.xlu0 %864
      %866 = vadd.xlane.f32.xlu0 %v803
      %v867 = vpop.xlane.xlu0 %866
      %868 = vadd.xlane.f32.xlu0 %v805
      %v869 = vpop.xlane.xlu0 %868
      %870 = vadd.xlane.f32.xlu0 %v807
      %v871 = vpop.xlane.xlu0 %870
      %872 = vadd.xlane.f32.xlu0 %v809
      %v873 = vpop.xlane.xlu0 %872
      %874 = vadd.xlane.f32.xlu0 %v811
      %v875 = vpop.xlane.xlu0 %874
      %876 = vadd.xlane.f32.xlu0 %v813
      %v877 = vpop.xlane.xlu0 %876
      %878 = vadd.xlane.f32.xlu0 %v815
      %v879 = vpop.xlane.xlu0 %878
      %880 = vadd.xlane.f32.xlu0 %v817
      %v881 = vpop.xlane.xlu0 %880
      %882 = vadd.xlane.f32.xlu0 %v819
      %v883 = vpop.xlane.xlu0 %882
      %884 = vadd.xlane.f32.xlu0 %v821
      %v885 = vpop.xlane.xlu0 %884
      %886 = vadd.xlane.f32.xlu0 %v823
      %v887 = vpop.xlane.xlu0 %886
      %888 = vadd.xlane.f32.xlu0 %v825
      %v889 = vpop.xlane.xlu0 %888
      %890 = vadd.xlane.f32.xlu0 %v827
      %v891 = vpop.xlane.xlu0 %890
      %892 = vadd.xlane.f32.xlu0 %v829
      %v893 = vpop.xlane.xlu0 %892
      %894 = vadd.xlane.f32.xlu0 %v831
      %v895 = vpop.xlane.xlu0 %894
      %896 = vadd.xlane.f32.xlu0 %v833
      %v897 = vpop.xlane.xlu0 %896
      %898 = vadd.xlane.f32.xlu0 %v835
      %v899 = vpop.xlane.xlu0 %898
      %900 = vadd.xlane.f32.xlu0 %v837
      %v901 = vpop.xlane.xlu0 %900
      %902 = vadd.xlane.f32.xlu0 %v839
      %v903 = vpop.xlane.xlu0 %902
      %904 = vadd.xlane.f32.xlu0 %v841
      %v905 = vpop.xlane.xlu0 %904
      %906 = vadd.xlane.f32.xlu0 %v843
      %v907 = vpop.xlane.xlu0 %906
      %908 = vadd.xlane.f32.xlu0 %v845
      %v909 = vpop.xlane.xlu0 %908
      %910 = vadd.xlane.f32.xlu0 %v847
      %v911 = vpop.xlane.xlu0 %910
      %912 = vadd.xlane.f32.xlu0 %v849
      %v913 = vpop.xlane.xlu0 %912
      %914 = vadd.xlane.f32.xlu0 %v851
      %v915 = vpop.xlane.xlu0 %914
      %916 = vadd.xlane.f32.xlu0 %v853
      %v917 = vpop.xlane.xlu0 %916
      %918 = vadd.xlane.f32.xlu0 %v855
      %v919 = vpop.xlane.xlu0 %918
      %920 = vadd.xlane.f32.xlu0 %v857
      %v921 = vpop.xlane.xlu0 %920
      %922 = vadd.xlane.f32.xlu0 %v859
      %v923 = vpop.xlane.xlu0 %922
      %924 = vadd.xlane.f32.xlu0 %v861
      %v925 = vpop.xlane.xlu0 %924
      %926 = vadd.xlane.f32.xlu0 %v863
      %v927 = vpop.xlane.xlu0 %926
      %v928 = vrcp.pop %v865
      %v929 = vmul.f32 %v865, %v928
      %v930 = vsub.f32 1.0, %v929
      %v931 = vmul.f32 %v928, %v930
      %v932 = vadd.f32 %v928, %v931
      %vm933 = vweird.f32 %v865
      %vm934 = vweird.f32 %v928
      %vm935 = vmor %vm933, %vm934
      %v936 = vsel %vm935, %v928, %v932
      %v937 = vand.u32 2147483647, %v865
      %vm938 = vcmp.eq.f32.partialorder %v937, 8.507059e+37
      %v939 = vand.u32 %v865, 2147483648
      %v940 = vor.u32 1.1754944e-38, %v939
      %v941 = vsel %vm938, %v940, %v936
      %v942 = vmul.f32 %v801, %v941
      %v943 = vrcp.pop %v867
      %v944 = vmul.f32 %v867, %v943
      %v945 = vsub.f32 1.0, %v944
      %v946 = vmul.f32 %v943, %v945
      %v947 = vadd.f32 %v943, %v946
      %vm948 = vweird.f32 %v867
      %vm949 = vweird.f32 %v943
      %vm950 = vmor %vm948, %vm949
      %v951 = vsel %vm950, %v943, %v947
      %v952 = vand.u32 2147483647, %v867
      %vm953 = vcmp.eq.f32.partialorder %v952, 8.507059e+37
      %v954 = vand.u32 %v867, 2147483648
      %v955 = vor.u32 1.1754944e-38, %v954
      %v956 = vsel %vm953, %v955, %v951
      %v957 = vmul.f32 %v803, %v956
      %v958 = vrcp.pop %v869
      %v959 = vmul.f32 %v869, %v958
      %v960 = vsub.f32 1.0, %v959
      %v961 = vmul.f32 %v958, %v960
      %v962 = vadd.f32 %v958, %v961
      %vm963 = vweird.f32 %v869
      %vm964 = vweird.f32 %v958
      %vm965 = vmor %vm963, %vm964
      %v966 = vsel %vm965, %v958, %v962
      %v967 = vand.u32 2147483647, %v869
      %vm968 = vcmp.eq.f32.partialorder %v967, 8.507059e+37
      %v969 = vand.u32 %v869, 2147483648
      %v970 = vor.u32 1.1754944e-38, %v969
      %v971 = vsel %vm968, %v970, %v966
      %v972 = vmul.f32 %v805, %v971
      %v973 = vrcp.pop %v871
      %v974 = vmul.f32 %v871, %v973
      %v975 = vsub.f32 1.0, %v974
      %v976 = vmul.f32 %v973, %v975
      %v977 = vadd.f32 %v973, %v976
      %vm978 = vweird.f32 %v871
      %vm979 = vweird.f32 %v973
      %vm980 = vmor %vm978, %vm979
      %v981 = vsel %vm980, %v973, %v977
      %v982 = vand.u32 2147483647, %v871
      %vm983 = vcmp.eq.f32.partialorder %v982, 8.507059e+37
      %v984 = vand.u32 %v871, 2147483648
      %v985 = vor.u32 1.1754944e-38, %v984
      %v986 = vsel %vm983, %v985, %v981
      %v987 = vmul.f32 %v807, %v986
      %v988 = vrcp.pop %v873
      %v989 = vmul.f32 %v873, %v988
      %v990 = vsub.f32 1.0, %v989
      %v991 = vmul.f32 %v988, %v990
      %v992 = vadd.f32 %v988, %v991
      %vm993 = vweird.f32 %v873
      %vm994 = vweird.f32 %v988
      %vm995 = vmor %vm993, %vm994
      %v996 = vsel %vm995, %v988, %v992
      %v997 = vand.u32 2147483647, %v873
      %vm998 = vcmp.eq.f32.partialorder %v997, 8.507059e+37
      %v999 = vand.u32 %v873, 2147483648
      %v1000 = vor.u32 1.1754944e-38, %v999
      %v1001 = vsel %vm998, %v1000, %v996
      %v1002 = vmul.f32 %v809, %v1001
      %v1003 = vrcp.pop %v875
      %v1004 = vmul.f32 %v875, %v1003
      %v1005 = vsub.f32 1.0, %v1004
      %v1006 = vmul.f32 %v1003, %v1005
      %v1007 = vadd.f32 %v1003, %v1006
      %vm1008 = vweird.f32 %v875
      %vm1009 = vweird.f32 %v1003
      %vm1010 = vmor %vm1008, %vm1009
      %v1011 = vsel %vm1010, %v1003, %v1007
      %v1012 = vand.u32 2147483647, %v875
      %vm1013 = vcmp.eq.f32.partialorder %v1012, 8.507059e+37
      %v1014 = vand.u32 %v875, 2147483648
      %v1015 = vor.u32 1.1754944e-38, %v1014
      %v1016 = vsel %vm1013, %v1015, %v1011
      %v1017 = vmul.f32 %v811, %v1016
      %v1018 = vrcp.pop %v877
      %v1019 = vmul.f32 %v877, %v1018
      %v1020 = vsub.f32 1.0, %v1019
      %v1021 = vmul.f32 %v1018, %v1020
      %v1022 = vadd.f32 %v1018, %v1021
      %vm1023 = vweird.f32 %v877
      %vm1024 = vweird.f32 %v1018
      %vm1025 = vmor %vm1023, %vm1024
      %v1026 = vsel %vm1025, %v1018, %v1022
      %v1027 = vand.u32 2147483647, %v877
      %vm1028 = vcmp.eq.f32.partialorder %v1027, 8.507059e+37
      %v1029 = vand.u32 %v877, 2147483648
      %v1030 = vor.u32 1.1754944e-38, %v1029
      %v1031 = vsel %vm1028, %v1030, %v1026
      %v1032 = vmul.f32 %v813, %v1031
      %v1033 = vrcp.pop %v879
      %v1034 = vmul.f32 %v879, %v1033
      %v1035 = vsub.f32 1.0, %v1034
      %v1036 = vmul.f32 %v1033, %v1035
      %v1037 = vadd.f32 %v1033, %v1036
      %vm1038 = vweird.f32 %v879
      %vm1039 = vweird.f32 %v1033
      %vm1040 = vmor %vm1038, %vm1039
      %v1041 = vsel %vm1040, %v1033, %v1037
      %v1042 = vand.u32 2147483647, %v879
      %vm1043 = vcmp.eq.f32.partialorder %v1042, 8.507059e+37
      %v1044 = vand.u32 %v879, 2147483648
      %v1045 = vor.u32 1.1754944e-38, %v1044
      %v1046 = vsel %vm1043, %v1045, %v1041
      %v1047 = vmul.f32 %v815, %v1046
      %v1048 = vrcp.pop %v881
      %v1049 = vmul.f32 %v881, %v1048
      %v1050 = vsub.f32 1.0, %v1049
      %v1051 = vmul.f32 %v1048, %v1050
      %v1052 = vadd.f32 %v1048, %v1051
      %vm1053 = vweird.f32 %v881
      %vm1054 = vweird.f32 %v1048
      %vm1055 = vmor %vm1053, %vm1054
      %v1056 = vsel %vm1055, %v1048, %v1052
      %v1057 = vand.u32 2147483647, %v881
      %vm1058 = vcmp.eq.f32.partialorder %v1057, 8.507059e+37
      %v1059 = vand.u32 %v881, 2147483648
      %v1060 = vor.u32 1.1754944e-38, %v1059
      %v1061 = vsel %vm1058, %v1060, %v1056
      %v1062 = vmul.f32 %v817, %v1061
      %v1063 = vrcp.pop %v883
      %v1064 = vmul.f32 %v883, %v1063
      %v1065 = vsub.f32 1.0, %v1064
      %v1066 = vmul.f32 %v1063, %v1065
      %v1067 = vadd.f32 %v1063, %v1066
      %vm1068 = vweird.f32 %v883
      %vm1069 = vweird.f32 %v1063
      %vm1070 = vmor %vm1068, %vm1069
      %v1071 = vsel %vm1070, %v1063, %v1067
      %v1072 = vand.u32 2147483647, %v883
      %vm1073 = vcmp.eq.f32.partialorder %v1072, 8.507059e+37
      %v1074 = vand.u32 %v883, 2147483648
      %v1075 = vor.u32 1.1754944e-38, %v1074
      %v1076 = vsel %vm1073, %v1075, %v1071
      %v1077 = vmul.f32 %v819, %v1076
      %v1078 = vrcp.pop %v885
      %v1079 = vmul.f32 %v885, %v1078
      %v1080 = vsub.f32 1.0, %v1079
      %v1081 = vmul.f32 %v1078, %v1080
      %v1082 = vadd.f32 %v1078, %v1081
      %vm1083 = vweird.f32 %v885
      %vm1084 = vweird.f32 %v1078
      %vm1085 = vmor %vm1083, %vm1084
      %v1086 = vsel %vm1085, %v1078, %v1082
      %v1087 = vand.u32 2147483647, %v885
      %vm1088 = vcmp.eq.f32.partialorder %v1087, 8.507059e+37
      %v1089 = vand.u32 %v885, 2147483648
      %v1090 = vor.u32 1.1754944e-38, %v1089
      %v1091 = vsel %vm1088, %v1090, %v1086
      %v1092 = vmul.f32 %v821, %v1091
      %v1093 = vrcp.pop %v887
      %v1094 = vmul.f32 %v887, %v1093
      %v1095 = vsub.f32 1.0, %v1094
      %v1096 = vmul.f32 %v1093, %v1095
      %v1097 = vadd.f32 %v1093, %v1096
      %vm1098 = vweird.f32 %v887
      %vm1099 = vweird.f32 %v1093
      %vm1100 = vmor %vm1098, %vm1099
      %v1101 = vsel %vm1100, %v1093, %v1097
      %v1102 = vand.u32 2147483647, %v887
      %vm1103 = vcmp.eq.f32.partialorder %v1102, 8.507059e+37
      %v1104 = vand.u32 %v887, 2147483648
      %v1105 = vor.u32 1.1754944e-38, %v1104
      %v1106 = vsel %vm1103, %v1105, %v1101
      %v1107 = vmul.f32 %v823, %v1106
      %v1108 = vrcp.pop %v889
      %v1109 = vmul.f32 %v889, %v1108
      %v1110 = vsub.f32 1.0, %v1109
      %v1111 = vmul.f32 %v1108, %v1110
      %v1112 = vadd.f32 %v1108, %v1111
      %vm1113 = vweird.f32 %v889
      %vm1114 = vweird.f32 %v1108
      %vm1115 = vmor %vm1113, %vm1114
      %v1116 = vsel %vm1115, %v1108, %v1112
      %v1117 = vand.u32 2147483647, %v889
      %vm1118 = vcmp.eq.f32.partialorder %v1117, 8.507059e+37
      %v1119 = vand.u32 %v889, 2147483648
      %v1120 = vor.u32 1.1754944e-38, %v1119
      %v1121 = vsel %vm1118, %v1120, %v1116
      %v1122 = vmul.f32 %v825, %v1121
      %v1123 = vrcp.pop %v891
      %v1124 = vmul.f32 %v891, %v1123
      %v1125 = vsub.f32 1.0, %v1124
      %v1126 = vmul.f32 %v1123, %v1125
      %v1127 = vadd.f32 %v1123, %v1126
      %vm1128 = vweird.f32 %v891
      %vm1129 = vweird.f32 %v1123
      %vm1130 = vmor %vm1128, %vm1129
      %v1131 = vsel %vm1130, %v1123, %v1127
      %v1132 = vand.u32 2147483647, %v891
      %vm1133 = vcmp.eq.f32.partialorder %v1132, 8.507059e+37
      %v1134 = vand.u32 %v891, 2147483648
      %v1135 = vor.u32 1.1754944e-38, %v1134
      %v1136 = vsel %vm1133, %v1135, %v1131
      %v1137 = vmul.f32 %v827, %v1136
      %v1138 = vrcp.pop %v893
      %v1139 = vmul.f32 %v893, %v1138
      %v1140 = vsub.f32 1.0, %v1139
      %v1141 = vmul.f32 %v1138, %v1140
      %v1142 = vadd.f32 %v1138, %v1141
      %vm1143 = vweird.f32 %v893
      %vm1144 = vweird.f32 %v1138
      %vm1145 = vmor %vm1143, %vm1144
      %v1146 = vsel %vm1145, %v1138, %v1142
      %v1147 = vand.u32 2147483647, %v893
      %vm1148 = vcmp.eq.f32.partialorder %v1147, 8.507059e+37
      %v1149 = vand.u32 %v893, 2147483648
      %v1150 = vor.u32 1.1754944e-38, %v1149
      %v1151 = vsel %vm1148, %v1150, %v1146
      %v1152 = vmul.f32 %v829, %v1151
      %v1153 = vrcp.pop %v895
      %v1154 = vmul.f32 %v895, %v1153
      %v1155 = vsub.f32 1.0, %v1154
      %v1156 = vmul.f32 %v1153, %v1155
      %v1157 = vadd.f32 %v1153, %v1156
      %vm1158 = vweird.f32 %v895
      %vm1159 = vweird.f32 %v1153
      %vm1160 = vmor %vm1158, %vm1159
      %v1161 = vsel %vm1160, %v1153, %v1157
      %v1162 = vand.u32 2147483647, %v895
      %vm1163 = vcmp.eq.f32.partialorder %v1162, 8.507059e+37
      %v1164 = vand.u32 %v895, 2147483648
      %v1165 = vor.u32 1.1754944e-38, %v1164
      %v1166 = vsel %vm1163, %v1165, %v1161
      %v1167 = vmul.f32 %v831, %v1166
      %v1168 = vrcp.pop %v897
      %v1169 = vmul.f32 %v897, %v1168
      %v1170 = vsub.f32 1.0, %v1169
      %v1171 = vmul.f32 %v1168, %v1170
      %v1172 = vadd.f32 %v1168, %v1171
      %vm1173 = vweird.f32 %v897
      %vm1174 = vweird.f32 %v1168
      %vm1175 = vmor %vm1173, %vm1174
      %v1176 = vsel %vm1175, %v1168, %v1172
      %v1177 = vand.u32 2147483647, %v897
      %vm1178 = vcmp.eq.f32.partialorder %v1177, 8.507059e+37
      %v1179 = vand.u32 %v897, 2147483648
      %v1180 = vor.u32 1.1754944e-38, %v1179
      %v1181 = vsel %vm1178, %v1180, %v1176
      %v1182 = vmul.f32 %v833, %v1181
      %v1183 = vrcp.pop %v899
      %v1184 = vmul.f32 %v899, %v1183
      %v1185 = vsub.f32 1.0, %v1184
      %v1186 = vmul.f32 %v1183, %v1185
      %v1187 = vadd.f32 %v1183, %v1186
      %vm1188 = vweird.f32 %v899
      %vm1189 = vweird.f32 %v1183
      %vm1190 = vmor %vm1188, %vm1189
      %v1191 = vsel %vm1190, %v1183, %v1187
      %v1192 = vand.u32 2147483647, %v899
      %vm1193 = vcmp.eq.f32.partialorder %v1192, 8.507059e+37
      %v1194 = vand.u32 %v899, 2147483648
      %v1195 = vor.u32 1.1754944e-38, %v1194
      %v1196 = vsel %vm1193, %v1195, %v1191
      %v1197 = vmul.f32 %v835, %v1196
      %v1198 = vrcp.pop %v901
      %v1199 = vmul.f32 %v901, %v1198
      %v1200 = vsub.f32 1.0, %v1199
      %v1201 = vmul.f32 %v1198, %v1200
      %v1202 = vadd.f32 %v1198, %v1201
      %vm1203 = vweird.f32 %v901
      %vm1204 = vweird.f32 %v1198
      %vm1205 = vmor %vm1203, %vm1204
      %v1206 = vsel %vm1205, %v1198, %v1202
      %v1207 = vand.u32 2147483647, %v901
      %vm1208 = vcmp.eq.f32.partialorder %v1207, 8.507059e+37
      %v1209 = vand.u32 %v901, 2147483648
      %v1210 = vor.u32 1.1754944e-38, %v1209
      %v1211 = vsel %vm1208, %v1210, %v1206
      %v1212 = vmul.f32 %v837, %v1211
      %v1213 = vrcp.pop %v903
      %v1214 = vmul.f32 %v903, %v1213
      %v1215 = vsub.f32 1.0, %v1214
      %v1216 = vmul.f32 %v1213, %v1215
      %v1217 = vadd.f32 %v1213, %v1216
      %vm1218 = vweird.f32 %v903
      %vm1219 = vweird.f32 %v1213
      %vm1220 = vmor %vm1218, %vm1219
      %v1221 = vsel %vm1220, %v1213, %v1217
      %v1222 = vand.u32 2147483647, %v903
      %vm1223 = vcmp.eq.f32.partialorder %v1222, 8.507059e+37
      %v1224 = vand.u32 %v903, 2147483648
      %v1225 = vor.u32 1.1754944e-38, %v1224
      %v1226 = vsel %vm1223, %v1225, %v1221
      %v1227 = vmul.f32 %v839, %v1226
      %v1228 = vrcp.pop %v905
      %v1229 = vmul.f32 %v905, %v1228
      %v1230 = vsub.f32 1.0, %v1229
      %v1231 = vmul.f32 %v1228, %v1230
      %v1232 = vadd.f32 %v1228, %v1231
      %vm1233 = vweird.f32 %v905
      %vm1234 = vweird.f32 %v1228
      %vm1235 = vmor %vm1233, %vm1234
      %v1236 = vsel %vm1235, %v1228, %v1232
      %v1237 = vand.u32 2147483647, %v905
      %vm1238 = vcmp.eq.f32.partialorder %v1237, 8.507059e+37
      %v1239 = vand.u32 %v905, 2147483648
      %v1240 = vor.u32 1.1754944e-38, %v1239
      %v1241 = vsel %vm1238, %v1240, %v1236
      %v1242 = vmul.f32 %v841, %v1241
      %v1243 = vrcp.pop %v907
      %v1244 = vmul.f32 %v907, %v1243
      %v1245 = vsub.f32 1.0, %v1244
      %v1246 = vmul.f32 %v1243, %v1245
      %v1247 = vadd.f32 %v1243, %v1246
      %vm1248 = vweird.f32 %v907
      %vm1249 = vweird.f32 %v1243
      %vm1250 = vmor %vm1248, %vm1249
      %v1251 = vsel %vm1250, %v1243, %v1247
      %v1252 = vand.u32 2147483647, %v907
      %vm1253 = vcmp.eq.f32.partialorder %v1252, 8.507059e+37
      %v1254 = vand.u32 %v907, 2147483648
      %v1255 = vor.u32 1.1754944e-38, %v1254
      %v1256 = vsel %vm1253, %v1255, %v1251
      %v1257 = vmul.f32 %v843, %v1256
      %v1258 = vrcp.pop %v909
      %v1259 = vmul.f32 %v909, %v1258
      %v1260 = vsub.f32 1.0, %v1259
      %v1261 = vmul.f32 %v1258, %v1260
      %v1262 = vadd.f32 %v1258, %v1261
      %vm1263 = vweird.f32 %v909
      %vm1264 = vweird.f32 %v1258
      %vm1265 = vmor %vm1263, %vm1264
      %v1266 = vsel %vm1265, %v1258, %v1262
      %v1267 = vand.u32 2147483647, %v909
      %vm1268 = vcmp.eq.f32.partialorder %v1267, 8.507059e+37
      %v1269 = vand.u32 %v909, 2147483648
      %v1270 = vor.u32 1.1754944e-38, %v1269
      %v1271 = vsel %vm1268, %v1270, %v1266
      %v1272 = vmul.f32 %v845, %v1271
      %v1273 = vrcp.pop %v911
      %v1274 = vmul.f32 %v911, %v1273
      %v1275 = vsub.f32 1.0, %v1274
      %v1276 = vmul.f32 %v1273, %v1275
      %v1277 = vadd.f32 %v1273, %v1276
      %vm1278 = vweird.f32 %v911
      %vm1279 = vweird.f32 %v1273
      %vm1280 = vmor %vm1278, %vm1279
      %v1281 = vsel %vm1280, %v1273, %v1277
      %v1282 = vand.u32 2147483647, %v911
      %vm1283 = vcmp.eq.f32.partialorder %v1282, 8.507059e+37
      %v1284 = vand.u32 %v911, 2147483648
      %v1285 = vor.u32 1.1754944e-38, %v1284
      %v1286 = vsel %vm1283, %v1285, %v1281
      %v1287 = vmul.f32 %v847, %v1286
      %v1288 = vrcp.pop %v913
      %v1289 = vmul.f32 %v913, %v1288
      %v1290 = vsub.f32 1.0, %v1289
      %v1291 = vmul.f32 %v1288, %v1290
      %v1292 = vadd.f32 %v1288, %v1291
      %vm1293 = vweird.f32 %v913
      %vm1294 = vweird.f32 %v1288
      %vm1295 = vmor %vm1293, %vm1294
      %v1296 = vsel %vm1295, %v1288, %v1292
      %v1297 = vand.u32 2147483647, %v913
      %vm1298 = vcmp.eq.f32.partialorder %v1297, 8.507059e+37
      %v1299 = vand.u32 %v913, 2147483648
      %v1300 = vor.u32 1.1754944e-38, %v1299
      %v1301 = vsel %vm1298, %v1300, %v1296
      %v1302 = vmul.f32 %v849, %v1301
      %v1303 = vrcp.pop %v915
      %v1304 = vmul.f32 %v915, %v1303
      %v1305 = vsub.f32 1.0, %v1304
      %v1306 = vmul.f32 %v1303, %v1305
      %v1307 = vadd.f32 %v1303, %v1306
      %vm1308 = vweird.f32 %v915
      %vm1309 = vweird.f32 %v1303
      %vm1310 = vmor %vm1308, %vm1309
      %v1311 = vsel %vm1310, %v1303, %v1307
      %v1312 = vand.u32 2147483647, %v915
      %vm1313 = vcmp.eq.f32.partialorder %v1312, 8.507059e+37
      %v1314 = vand.u32 %v915, 2147483648
      %v1315 = vor.u32 1.1754944e-38, %v1314
      %v1316 = vsel %vm1313, %v1315, %v1311
      %v1317 = vmul.f32 %v851, %v1316
      %v1318 = vrcp.pop %v917
      %v1319 = vmul.f32 %v917, %v1318
      %v1320 = vsub.f32 1.0, %v1319
      %v1321 = vmul.f32 %v1318, %v1320
      %v1322 = vadd.f32 %v1318, %v1321
      %vm1323 = vweird.f32 %v917
      %vm1324 = vweird.f32 %v1318
      %vm1325 = vmor %vm1323, %vm1324
      %v1326 = vsel %vm1325, %v1318, %v1322
      %v1327 = vand.u32 2147483647, %v917
      %vm1328 = vcmp.eq.f32.partialorder %v1327, 8.507059e+37
      %v1329 = vand.u32 %v917, 2147483648
      %v1330 = vor.u32 1.1754944e-38, %v1329
      %v1331 = vsel %vm1328, %v1330, %v1326
      %v1332 = vmul.f32 %v853, %v1331
      %v1333 = vrcp.pop %v919
      %v1334 = vmul.f32 %v919, %v1333
      %v1335 = vsub.f32 1.0, %v1334
      %v1336 = vmul.f32 %v1333, %v1335
      %v1337 = vadd.f32 %v1333, %v1336
      %vm1338 = vweird.f32 %v919
      %vm1339 = vweird.f32 %v1333
      %vm1340 = vmor %vm1338, %vm1339
      %v1341 = vsel %vm1340, %v1333, %v1337
      %v1342 = vand.u32 2147483647, %v919
      %vm1343 = vcmp.eq.f32.partialorder %v1342, 8.507059e+37
      %v1344 = vand.u32 %v919, 2147483648
      %v1345 = vor.u32 1.1754944e-38, %v1344
      %v1346 = vsel %vm1343, %v1345, %v1341
      %v1347 = vmul.f32 %v855, %v1346
      %v1348 = vrcp.pop %v921
      %v1349 = vmul.f32 %v921, %v1348
      %v1350 = vsub.f32 1.0, %v1349
      %v1351 = vmul.f32 %v1348, %v1350
      %v1352 = vadd.f32 %v1348, %v1351
      %vm1353 = vweird.f32 %v921
      %vm1354 = vweird.f32 %v1348
      %vm1355 = vmor %vm1353, %vm1354
      %v1356 = vsel %vm1355, %v1348, %v1352
      %v1357 = vand.u32 2147483647, %v921
      %vm1358 = vcmp.eq.f32.partialorder %v1357, 8.507059e+37
      %v1359 = vand.u32 %v921, 2147483648
      %v1360 = vor.u32 1.1754944e-38, %v1359
      %v1361 = vsel %vm1358, %v1360, %v1356
      %v1362 = vmul.f32 %v857, %v1361
      %v1363 = vrcp.pop %v923
      %v1364 = vmul.f32 %v923, %v1363
      %v1365 = vsub.f32 1.0, %v1364
      %v1366 = vmul.f32 %v1363, %v1365
      %v1367 = vadd.f32 %v1363, %v1366
      %vm1368 = vweird.f32 %v923
      %vm1369 = vweird.f32 %v1363
      %vm1370 = vmor %vm1368, %vm1369
      %v1371 = vsel %vm1370, %v1363, %v1367
      %v1372 = vand.u32 2147483647, %v923
      %vm1373 = vcmp.eq.f32.partialorder %v1372, 8.507059e+37
      %v1374 = vand.u32 %v923, 2147483648
      %v1375 = vor.u32 1.1754944e-38, %v1374
      %v1376 = vsel %vm1373, %v1375, %v1371
      %v1377 = vmul.f32 %v859, %v1376
      %v1378 = vrcp.pop %v925
      %v1379 = vmul.f32 %v925, %v1378
      %v1380 = vsub.f32 1.0, %v1379
      %v1381 = vmul.f32 %v1378, %v1380
      %v1382 = vadd.f32 %v1378, %v1381
      %vm1383 = vweird.f32 %v925
      %vm1384 = vweird.f32 %v1378
      %vm1385 = vmor %vm1383, %vm1384
      %v1386 = vsel %vm1385, %v1378, %v1382
      %v1387 = vand.u32 2147483647, %v925
      %vm1388 = vcmp.eq.f32.partialorder %v1387, 8.507059e+37
      %v1389 = vand.u32 %v925, 2147483648
      %v1390 = vor.u32 1.1754944e-38, %v1389
      %v1391 = vsel %vm1388, %v1390, %v1386
      %v1392 = vmul.f32 %v861, %v1391
      %v1393 = vrcp.pop %v927
      %v1394 = vmul.f32 %v927, %v1393
      %v1395 = vsub.f32 1.0, %v1394
      %v1396 = vmul.f32 %v1393, %v1395
      %v1397 = vadd.f32 %v1393, %v1396
      %vm1398 = vweird.f32 %v927
      %vm1399 = vweird.f32 %v1393
      %vm1400 = vmor %vm1398, %vm1399
      %v1401 = vsel %vm1400, %v1393, %v1397
      %v1402 = vand.u32 2147483647, %v927
      %vm1403 = vcmp.eq.f32.partialorder %v1402, 8.507059e+37
      %v1404 = vand.u32 %v927, 2147483648
      %v1405 = vor.u32 1.1754944e-38, %v1404
      %v1406 = vsel %vm1403, %v1405, %v1401
      %v1407 = vmul.f32 %v863, %v1406
      %vm1408 = vcmask 31744
      %1409 = vst.msk [vmem:[%s226] sm:$0xff] %vm1408, %v942
      %1410 = vst.msk [vmem:[%s226 + $0x8] sm:$0xff] %vm1408, %v957
      %1411 = vst.msk [vmem:[%s226 + $0x10] sm:$0xff] %vm1408, %v972
      %1412 = vst.msk [vmem:[%s226 + $0x18] sm:$0xff] %vm1408, %v987
      %1413 = vst.msk [vmem:[%s226 + $0x20] sm:$0xff] %vm1408, %v1002
      %1414 = vst.msk [vmem:[%s226 + $0x28] sm:$0xff] %vm1408, %v1017
      %1415 = vst.msk [vmem:[%s226 + $0x30] sm:$0xff] %vm1408, %v1032
      %1416 = vst.msk [vmem:[%s226 + $0x38] sm:$0xff] %vm1408, %v1047
      %1417 = vst.msk [vmem:[%s226 + $0x40] sm:$0xff] %vm1408, %v1062
      %1418 = vst.msk [vmem:[%s226 + $0x48] sm:$0xff] %vm1408, %v1077
      %1419 = vst.msk [vmem:[%s226 + $0x50] sm:$0xff] %vm1408, %v1092
      %1420 = vst.msk [vmem:[%s226 + $0x58] sm:$0xff] %vm1408, %v1107
      %1421 = vst.msk [vmem:[%s226 + $0x60] sm:$0xff] %vm1408, %v1122
      %1422 = vst.msk [vmem:[%s226 + $0x68] sm:$0xff] %vm1408, %v1137
      %1423 = vst.msk [vmem:[%s226 + $0x70] sm:$0xff] %vm1408, %v1152
      %1424 = vst.msk [vmem:[%s226 + $0x78] sm:$0xff] %vm1408, %v1167
      %1425 = vst.msk [vmem:[%s226 + $0x80] sm:$0xff] %vm1408, %v1182
      %1426 = vst.msk [vmem:[%s226 + $0x88] sm:$0xff] %vm1408, %v1197
      %1427 = vst.msk [vmem:[%s226 + $0x90] sm:$0xff] %vm1408, %v1212
      %1428 = vst.msk [vmem:[%s226 + $0x98] sm:$0xff] %vm1408, %v1227
      %1429 = vst.msk [vmem:[%s226 + $0xa0] sm:$0xff] %vm1408, %v1242
      %1430 = vst.msk [vmem:[%s226 + $0xa8] sm:$0xff] %vm1408, %v1257
      %1431 = vst.msk [vmem:[%s226 + $0xb0] sm:$0xff] %vm1408, %v1272
      %1432 = vst.msk [vmem:[%s226 + $0xb8] sm:$0xff] %vm1408, %v1287
      %1433 = vst.msk [vmem:[%s226 + $0xc0] sm:$0xff] %vm1408, %v1302
      %1434 = vst.msk [vmem:[%s226 + $0xc8] sm:$0xff] %vm1408, %v1317
      %1435 = vst.msk [vmem:[%s226 + $0xd0] sm:$0xff] %vm1408, %v1332
      %1436 = vst.msk [vmem:[%s226 + $0xd8] sm:$0xff] %vm1408, %v1347
      %1437 = vst.msk [vmem:[%s226 + $0xe0] sm:$0xff] %vm1408, %v1362
      %1438 = vst.msk [vmem:[%s226 + $0xe8] sm:$0xff] %vm1408, %v1377
      %1439 = vst.msk [vmem:[%s226 + $0xf0] sm:$0xff] %vm1408, %v1392
      %1440 = vst.msk [vmem:[%s226 + $0xf8] sm:$0xff] %vm1408, %v1407
      %s1441 = smul.u32 32, %s16
      %p1442 = scmp.lt.s32.totalorder %s1441, 63
      %s1443 = scalar_select %p1442, %s1441, 63
      %s1444 = smul.addr %s1443, 8
      %s1445 = scalar_lea.vmem %s5, %s1444
      // Predicated region
      $region41: #{classical_transfer_learning_forward.1} parent=39 // pred_check
        %p1446 = pneg %p144
      $region42: #{classical_transfer_learning_forward.1} parent=39 // pred_check_branch
        %1448 = sbr.rel (%p1446) target = $region44
      $region43: #{classical_transfer_learning_forward.1} parent=39 // pred_region
        %s1449 = smul.u32 32, %s16
      $region44: #{classical_transfer_learning_forward.1} parent=39 // pred_fallthru
        _
    $region40: #{classical_transfer_learning_forward.1} parent=5 // pred_fallthru
      _
    %p1450 = scmp.le.s32.totalorder 2, %s11
    // Predicated region
    $region45: #{classical_transfer_learning_forward.1} parent=5 // pred_check
      %p1451 = pneg %p1450
    $region46: #{classical_transfer_learning_forward.1} parent=5 // pred_check_branch
      %1453 = sbr.rel (%p1451) target = $region48
    $region47: #{classical_transfer_learning_forward.1} parent=5 // pred_region
      %s1454 = ssub.s32 %s11, 2
      // Predicated region
      $region49: #{classical_transfer_learning_forward.1} parent=47 // pred_check
        %p1455 = pneg %p150
      $region50: #{classical_transfer_learning_forward.1} parent=47 // pred_check_branch
        %1457 = sbr.rel (%p1455) target = $region52
      $region51: #{classical_transfer_learning_forward.1} parent=47 // pred_region
        %s1458 = smul.u32 32, %s17
        %p1459 = scmp.lt.s32.totalorder %s1458, 63
        %s1460 = scalar_select %p1459, %s1458, 63
        %s1461 = smul.addr %s1460, 8
        %s1462 = scalar_lea.vmem %s5, %s1461
      $region52: #{classical_transfer_learning_forward.1} parent=47 // pred_fallthru
        _
    $region48: #{classical_transfer_learning_forward.1} parent=5 // pred_fallthru
      _
  $region6: #{classical_transfer_learning_forward.1} parent=0 // loop_footer
    %s15 = sadd.s32 1, %s11
  $region7: #{classical_transfer_learning_forward.1} parent=0 // loop_footer_branch
    %10 = sbr.rel target = $region3
  $region8: #{classical_transfer_learning_forward.1} parent=0 // loop_exit
    _

</llo_original>
